<compile_context>
chip_gen: v6e
topology: v6e:2x2x1
jax: 0.10.0
libtpu: 0.0.40
codegen_flags: <defaults>
</compile_context>

<pallas_src>
import functools

import jax
import jax.numpy as jnp
from jax import lax
from jax.experimental import pallas as pl
from jax.experimental.pallas import tpu as pltpu

# MXU operand dtype for the big matmuls (f32 accumulation everywhere).
_MXU_DTYPE = jnp.bfloat16


def _round_up(x, m):
    return (x + m - 1) // m * m


# ----------------------------------------------------------------------------
# Kernel 1: tiled dense layer   y = x @ W + b   (used for the spatial fc)
# ----------------------------------------------------------------------------
def _matmul_kernel(x_ref, w_ref, b_ref, o_ref, acc_ref):
    k = pl.program_id(2)

    @pl.when(k == 0)
    def _():
        acc_ref[...] = jnp.zeros_like(acc_ref)

    acc_ref[...] += jnp.dot(
        x_ref[...].astype(_MXU_DTYPE),
        w_ref[...].astype(_MXU_DTYPE),
        preferred_element_type=jnp.float32,
    )

    @pl.when(k == pl.num_programs(2) - 1)
    def _():
        o_ref[...] = (acc_ref[...] + b_ref[...]).astype(o_ref.dtype)


def linear_tiled(x, w, b, *, tm=256, tn=256, tk=512):
    """x: [M, K], w: [K, N], b: [1, N] -> [M, N].

    Tiled + double-buffered; dims are zero-padded to tile multiples (K-padding
    contributes 0 to the accumulation, M/N padding is sliced off).  Default
    tile budget (~a few MiB with double buffering) fits comfortably inside the
    v7x 64 MiB VMEM as well as v5e/v6e.
    """
    M, K = x.shape
    N = w.shape[1]
    tm = min(tm, _round_up(M, 8))
    tk = min(tk, _round_up(K, 128))
    tn = min(tn, _round_up(N, 128))
    Mp, Kp, Np = _round_up(M, tm), _round_up(K, tk), _round_up(N, tn)

    xp = jnp.pad(x, ((0, Mp - M), (0, Kp - K))) if (Mp, Kp) != (M, K) else x
    wp = jnp.pad(w, ((0, Kp - K), (0, Np - N))) if (Kp, Np) != (K, N) else w
    bp = jnp.pad(b, ((0, 0), (0, Np - N))) if Np != N else b

    out = pl.pallas_call(
        _matmul_kernel,
        out_shape=jax.ShapeDtypeStruct((Mp, Np), jnp.float32),
        grid_spec=pltpu.PrefetchScalarGridSpec(
            num_scalar_prefetch=0,
            grid=(Mp // tm, Np // tn, Kp // tk),
            in_specs=[
                pl.BlockSpec((tm, tk), lambda i, j, k: (i, k)),
                pl.BlockSpec((tk, tn), lambda i, j, k: (k, j)),
                pl.BlockSpec((1, tn), lambda i, j, k: (0, j)),
            ],
            out_specs=pl.BlockSpec((tm, tn), lambda i, j, k: (i, j)),
            scratch_shapes=[pltpu.VMEM((tm, tn), jnp.float32)],
        ),
        compiler_params=pltpu.CompilerParams(
            dimension_semantics=("parallel", "parallel", "arbitrary")),
    )(xp, wp, bp)
    return out[:M, :N] if (Mp, Np) != (M, N) else out


# ----------------------------------------------------------------------------
# Kernel 2: LSTM encoder, returns final hidden state at step qlen[b]-1
# ----------------------------------------------------------------------------
def _lstm_kernel(x_ref, wi_ref, wh_ref, b_ref, qlen_ref, h_out_ref, gx_ref,
                 *, hidden):
    T, B, E = x_ref.shape
    H = hidden

    # Hoisted input projection: one big MXU matmul (T*B rows) instead of T tiny
    # B-row matmuls inside the recurrence.
    x2d = x_ref[...].reshape(T * B, E)
    gx_ref[...] = (
        jnp.dot(x2d.astype(_MXU_DTYPE), wi_ref[...].astype(_MXU_DTYPE),
                preferred_element_type=jnp.float32)
        + b_ref[...]
    ).reshape(T, B, 4 * H)

    wh_bf = wh_ref[...].astype(_MXU_DTYPE)   # [H, 4H], cast ONCE (MXU operand)
    qlen = qlen_ref[...]                     # [B, 1] int32 -- loaded ONCE

    def step(t, carry):
        h, c = carry
        gates = gx_ref[t] + jnp.dot(h.astype(_MXU_DTYPE), wh_bf,
                                    preferred_element_type=jnp.float32)
        # PyTorch LSTM gate order: i, f, g, o
        # TODO(synk): for production configs make H a multiple of 128 (or lay the
        # gates out as [4, H]) so these slices are lane-aligned.
        i_g = jax.nn.sigmoid(gates[:, 0:H])
        f_g = jax.nn.sigmoid(gates[:, H:2 * H])
        g_g = jnp.tanh(gates[:, 2 * H:3 * H])
        o_g = jax.nn.sigmoid(gates[:, 3 * H:4 * H])
        c_new = f_g * c + i_g * g_g
        h_new = o_g * jnp.tanh(c_new)
        valid = t < qlen      # mask padded steps (variable question lengths)
        return jnp.where(valid, h_new, h), jnp.where(valid, c_new, c)

    h0 = jnp.zeros((B, H), jnp.float32)
    c0 = jnp.zeros((B, H), jnp.float32)
    h_fin, _ = lax.fori_loop(0, T, step, (h0, c0))
    h_out_ref[...] = h_fin


def lstm_final_hidden(x_tbe, wi, wh, b, qlen):
    """x_tbe: [T, B, E] (time-major), qlen: [B, 1] int32 -> final hidden [B, H]."""
    T, B, E = x_tbe.shape
    H4 = wi.shape[1]
    H = H4 // 4
    kernel = functools.partial(_lstm_kernel, hidden=H)
    return pl.pallas_call(
        kernel,
        out_shape=jax.ShapeDtypeStruct((B, H), jnp.float32),
        grid=(1,),
        in_specs=[
            pl.BlockSpec((T, B, E), lambda i: (0, 0, 0)),
            pl.BlockSpec((E, H4), lambda i: (0, 0)),
            pl.BlockSpec((H, H4), lambda i: (0, 0)),
            pl.BlockSpec((1, H4), lambda i: (0, 0)),
            pl.BlockSpec((B, 1), lambda i: (0, 0)),
        ],
        out_specs=pl.BlockSpec((B, H), lambda i: (0, 0)),
        scratch_shapes=[pltpu.VMEM((T, B, H4), jnp.float32)],
        compiler_params=pltpu.CompilerParams(
            dimension_semantics=("arbitrary",)),
    )(x_tbe, wi, wh, b, qlen)


# ----------------------------------------------------------------------------
# Kernel 3: fused stacked-attention layers + classifier
#   (weights shared across layers -> ff_image(vi) hoisted; vi resident in VMEM)
# ----------------------------------------------------------------------------
def _san_cls_kernel(vi_ref, vq_ref, wi_ref, bi_ref, wq_ref, bq_ref, wa_ref,
                    ba_ref, cw_ref, cb_ref, o_ref, *, num_att_layers):
    B, R, D = vi_ref.shape
    vi_bf = vi_ref[...].astype(_MXU_DTYPE)                # [B, R, D], resident in VMEM

    # ff_image(vi) is identical for every (weight-tied) layer -> compute once.
    hi = (
        jnp.dot(vi_bf.reshape(B * R, D),
                wi_ref[...].astype(_MXU_DTYPE),
                preferred_element_type=jnp.float32)
        + bi_ref[...]
    ).reshape(B, R, -1)                                   # [B, R, K]

    # Hoist the (shared) ff_ques weights out of the unrolled layer loop.
    wq_bf = wq_ref[...].astype(_MXU_DTYPE)                # [D, K]
    bq = bq_ref[...]                                      # [1, K]
    wa = wa_ref[...][None]                                # [1, 1, K]
    ba = ba_ref[0, 0]                                     # scalar (softmax-invariant)

    u = vq_ref[...]                                       # [B, D]
    for _ in range(num_att_layers):
        hq = jnp.dot(u.astype(_MXU_DTYPE), wq_bf,
                     preferred_element_type=jnp.float32) + bq
        ha = jnp.tanh(hi + hq[:, None, :])                # [B, R, K]
        scores = jnp.sum(ha * wa, axis=-1) + ba           # [B, R]  (XLU reduce)
        m = jnp.max(scores, axis=1, keepdims=True)
        e = jnp.exp(scores - m)
        p = e * pl.reciprocal(jnp.sum(e, axis=1, keepdims=True), approx=True)
        # Attended image: contraction over regions on the MXU (batched matmul).
        attended = jnp.einsum(
            "bqr,brd->bqd", p[:, None, :].astype(_MXU_DTYPE), vi_bf,
            preferred_element_type=jnp.float32)[:, 0, :]  # [B, D]
        u = attended + u

    # classifier (output width pre-padded to a multiple of 128 by the wrapper
    # so this store is an unmasked lane-dense vst).
    o_ref[...] = (
        jnp.dot(u.astype(_MXU_DTYPE), cw_ref[...].astype(_MXU_DTYPE),
                preferred_element_type=jnp.float32)
        + cb_ref[...]
    ).astype(o_ref.dtype)


def san_stack_classifier(vi, vq, wi, bi, wq, bq, wa, ba, cw, cb,
                         num_att_layers):
    B, R, D = vi.shape
    K = wi.shape[1]
    Ncls = cw.shape[1]
    kernel = functools.partial(_san_cls_kernel, num_att_layers=num_att_layers)
    return pl.pallas_call(
        kernel,
        out_shape=jax.ShapeDtypeStruct((B, Ncls), jnp.float32),
        grid=(1,),
        in_specs=[
            pl.BlockSpec((B, R, D), lambda i: (0, 0, 0)),
            pl.BlockSpec((B, D), lambda i: (0, 0)),
            pl.BlockSpec((D, K), lambda i: (0, 0)),
            pl.BlockSpec((1, K), lambda i: (0, 0)),
            pl.BlockSpec((D, K), lambda i: (0, 0)),
            pl.BlockSpec((1, K), lambda i: (0, 0)),
            pl.BlockSpec((1, K), lambda i: (0, 0)),
            pl.BlockSpec((1, 1), lambda i: (0, 0)),
            pl.BlockSpec((D, Ncls), lambda i: (0, 0)),
            pl.BlockSpec((1, Ncls), lambda i: (0, 0)),
        ],
        out_specs=pl.BlockSpec((B, Ncls), lambda i: (0, 0)),
        compiler_params=pltpu.CompilerParams(
            dimension_semantics=("arbitrary",)),
    )(vi, vq, wi, bi, wq, bq, wa, ba, cw, cb)


# ----------------------------------------------------------------------------
# Parameter init (deterministic, synthetic)
# ----------------------------------------------------------------------------
def init_params(key, vocab_size, vocab_embed, hidden, feat_c, att_ff,
                num_classes):
    ks = jax.random.split(key, 8)
    s = 0.05
    p = {}
    # SpatialResnetEncoder.fc
    p["spatial_fc_w"] = jax.random.normal(ks[0], (feat_c, hidden), jnp.float32) * s
    p["spatial_fc_b"] = jnp.zeros((1, hidden), jnp.float32)
    # EncoderRNN: embedding + LSTM (1 layer, unidirectional)
    p["embed"] = jax.random.normal(ks[1], (vocab_size, vocab_embed), jnp.float32) * s
    p["lstm_wi"] = jax.random.normal(ks[2], (vocab_embed, 4 * hidden), jnp.float32) * s
    p["lstm_wh"] = jax.random.normal(ks[3], (hidden, 4 * hidden), jnp.float32) * s
    p["lstm_b"] = jnp.zeros((1, 4 * hidden), jnp.float32)   # pre-summed b_ih + b_hh
    # StackedAttention (single weight set shared by all layers, matching
    # nn.ModuleList([module] * num_att_layers) weight tying)
    p["san_wi"] = jax.random.normal(ks[4], (hidden, att_ff), jnp.float32) * s
    p["san_bi"] = jnp.zeros((1, att_ff), jnp.float32)
    p["san_wq"] = jax.random.normal(ks[5], (hidden, att_ff), jnp.float32) * s
    p["san_bq"] = jnp.zeros((1, att_ff), jnp.float32)
    p["san_wa"] = jax.random.normal(ks[6], (1, att_ff), jnp.float32) * s
    p["san_ba"] = jnp.zeros((1, 1), jnp.float32)
    # classifier: Linear(question_dim=hidden, 1000)
    p["cls_w"] = jax.random.normal(ks[7], (hidden, num_classes), jnp.float32) * s
    p["cls_b"] = jnp.zeros((1, num_classes), jnp.float32)
    return p


# ----------------------------------------------------------------------------
# Full forward pass (glue in plain JAX, hot paths in Pallas kernels)
# ----------------------------------------------------------------------------
def multi_savqa_forward(params, features, questions, qlengths, num_att_layers=2):
    B, C, H, W = features.shape
    R = H * W
    hidden = params["spatial_fc_w"].shape[1]

    # SpatialResnetEncoder: NCHW -> [B*R, C] -> tiled fc -> [B, R, hidden]
    feats = jnp.transpose(features, (0, 2, 3, 1)).reshape(B * R, C)
    vi = linear_tiled(feats, params["spatial_fc_w"], params["spatial_fc_b"])
    vi = vi.reshape(B, R, hidden)
    # self.dropout(features): p=0 -> identity

    # EncoderRNN: embedding lookup (plain JAX glue), LSTM in Pallas,
    # final hidden taken per question length.
    x = params["embed"][questions]            # [B, T, E] gather (host-side glue)
    x = jnp.transpose(x, (1, 0, 2))           # time-major [T, B, E]
    qlen = qlengths.reshape(B, 1).astype(jnp.int32)
    vq = lstm_final_hidden(x, params["lstm_wi"], params["lstm_wh"],
                           params["lstm_b"], qlen)          # [B, hidden]

    # Fused stacked-attention layers + classifier (classes padded to a lane
    # multiple so the final store is unmasked; sliced back afterwards).
    num_classes = params["cls_w"].shape[1]
    ncls_pad = _round_up(num_classes, 128)
    cw = jnp.pad(params["cls_w"], ((0, 0), (0, ncls_pad - num_classes)))
    cb = jnp.pad(params["cls_b"], ((0, 0), (0, ncls_pad - num_classes)))
    out = san_stack_classifier(vi, vq,
                               params["san_wi"], params["san_bi"],
                               params["san_wq"], params["san_bq"],
                               params["san_wa"], params["san_ba"],
                               cw, cb, num_att_layers)
    # self.dropout(attended_hidden): p=0 -> identity
    return out[:, :num_classes]               # [B, 1000]


if __name__ == "__main__":
    # Small shapes consistent with the module's forward.
    B, FEAT_C, FH, FW = 2, 32, 4, 4       # image spatial features (NCHW)
    VOCAB, EMB, HIDDEN = 50, 16, 32       # vocab_size, vocab_embed_size, hidden_size
    T = 8                                  # max question length
    ATT_FF = 64                            # att_ff_size
    NUM_ATT_LAYERS = 2
    NUM_CLASSES = 1000

    key = jax.random.PRNGKey(0)
    k_feat, k_q, k_param = jax.random.split(key, 3)

    features = jax.random.normal(k_feat, (B, FEAT_C, FH, FW), jnp.float32)
    questions = jax.random.randint(k_q, (B, T), 0, VOCAB, dtype=jnp.int32)
    qlengths = jnp.array([T, T - 3], dtype=jnp.int32)

    params = init_params(k_param, VOCAB, EMB, HIDDEN, FEAT_C, ATT_FF, NUM_CLASSES)

    out = multi_savqa_forward(params, features, questions, qlengths,
                              num_att_layers=NUM_ATT_LAYERS)
    out = jax.block_until_ready(out)
    assert out.shape == (B, NUM_CLASSES), out.shape
    assert bool(jnp.all(jnp.isfinite(out)))
    print("KERNEL_OK")
</pallas_src>

<mosaic_0001>
module attributes {stable_mosaic.version = 11 : i64} {
  func.func @_matmul_kernel(%arg0: i32, %arg1: i32, %arg2: i32, %arg3: memref<32x128xf32, #tpu.memory_space<vmem>>, %arg4: memref<128x128xf32, #tpu.memory_space<vmem>>, %arg5: memref<1x128xf32, #tpu.memory_space<vmem>>, %arg6: memref<32x128xf32, #tpu.memory_space<vmem>>, %arg7: memref<32x128xf32, #tpu.memory_space<vmem>>) attributes {dimension_semantics = [#tpu.dimension_semantics<parallel>, #tpu.dimension_semantics<parallel>, #tpu.dimension_semantics<arbitrary>], iteration_bounds = array<i64: 1, 1, 1>, scalar_prefetch = 0 : i64, scratch_operands = 1 : i64, tpu.core_type = #tpu.core_type<tc>, window_params = [{transform_indices = @transform_0, window_bounds = array<i64: 32, 128>}, {transform_indices = @transform_1, window_bounds = array<i64: 128, 128>}, {transform_indices = @transform_2, window_bounds = array<i64: 1, 128>}, {transform_indices = @transform_3, window_bounds = array<i64: 32, 128>}]} {
    %c0_i32 = arith.constant 0 : i32
    %0 = arith.cmpi eq, %arg2, %c0_i32 : i32
    %1 = arith.extui %0 : i1 to i32
    %c0_i32_0 = arith.constant 0 : i32
    %2 = arith.cmpi ne, %1, %c0_i32_0 : i32
    scf.if %2 {
      %cst_10 = arith.constant 0.000000e+00 : f32
      %14 = vector.broadcast %cst_10 : f32 to vector<32x128xf32>
      %c0_11 = arith.constant 0 : index
      %c0_12 = arith.constant 0 : index
      %15 = vector.load %arg7[%c0_11, %c0_12] : memref<32x128xf32, #tpu.memory_space<vmem>>, vector<32x128xf32>
      tpu.vector_store %arg7[%c0_11, %c0_12], %14 {strides = array<i32>} : memref<32x128xf32, #tpu.memory_space<vmem>>, vector<32x128xf32>,
    } else {
    }
    %c0 = arith.constant 0 : index
    %c0_1 = arith.constant 0 : index
    %3 = vector.load %arg7[%c0, %c0_1] : memref<32x128xf32, #tpu.memory_space<vmem>>, vector<32x128xf32>
    %c0_2 = arith.constant 0 : index
    %c0_3 = arith.constant 0 : index
    %4 = vector.load %arg3[%c0_2, %c0_3] : memref<32x128xf32, #tpu.memory_space<vmem>>, vector<32x128xf32>
    %5 = arith.truncf %4 : vector<32x128xf32> to vector<32x128xbf16>
    %c0_4 = arith.constant 0 : index
    %c0_5 = arith.constant 0 : index
    %6 = vector.load %arg4[%c0_4, %c0_5] : memref<128x128xf32, #tpu.memory_space<vmem>>, vector<128x128xf32>
    %7 = arith.truncf %6 : vector<128x128xf32> to vector<128x128xbf16>
    %cst = arith.constant dense<0.000000e+00> : vector<32x128xf32>
    %8 = tpu.matmul %5, %7, %cst {dimension_numbers = #tpu.dot_dimension_numbers<[1], [0], [0], [1], [0, 0, 1, 1], [], []>} : vector<32x128xbf16>, vector<128x128xbf16>, vector<32x128xf32> -> vector<32x128xf32>
    %9 = arith.addf %3, %8 : vector<32x128xf32>
    %c0_6 = arith.constant 0 : index
    %c0_7 = arith.constant 0 : index
    %10 = vector.load %arg7[%c0_6, %c0_7] : memref<32x128xf32, #tpu.memory_space<vmem>>, vector<32x128xf32>
    tpu.vector_store %arg7[%c0_6, %c0_7], %9 {strides = array<i32>} : memref<32x128xf32, #tpu.memory_space<vmem>>, vector<32x128xf32>,
    %c0_i32_8 = arith.constant 0 : i32
    %11 = arith.cmpi eq, %arg2, %c0_i32_8 : i32
    %12 = arith.extui %11 : i1 to i32
    %c0_i32_9 = arith.constant 0 : i32
    %13 = arith.cmpi ne, %12, %c0_i32_9 : i32
    scf.if %13 {
      %c0_10 = arith.constant 0 : index
      %c0_11 = arith.constant 0 : index
      %14 = vector.load %arg7[%c0_10, %c0_11] : memref<32x128xf32, #tpu.memory_space<vmem>>, vector<32x128xf32>
      %c0_12 = arith.constant 0 : index
      %c0_13 = arith.constant 0 : index
      %15 = vector.load %arg5[%c0_12, %c0_13] : memref<1x128xf32, #tpu.memory_space<vmem>>, vector<1x128xf32>
      %16 = vector.broadcast %15 : vector<1x128xf32> to vector<32x128xf32>
      %17 = arith.addf %14, %16 : vector<32x128xf32>
      %c0_14 = arith.constant 0 : index
      %c0_15 = arith.constant 0 : index
      %18 = vector.load %arg6[%c0_14, %c0_15] : memref<32x128xf32, #tpu.memory_space<vmem>>, vector<32x128xf32>
      tpu.vector_store %arg6[%c0_14, %c0_15], %17 {strides = array<i32>} : memref<32x128xf32, #tpu.memory_space<vmem>>, vector<32x128xf32>,
    } else {
    }
    return
  }
  func.func @transform_0(%arg0: i32, %arg1: i32, %arg2: i32) -> (i32, i32) {
    %c0_i32 = arith.constant 0 : i32
    return %arg0, %arg2 : i32, i32
  }
  func.func @transform_1(%arg0: i32, %arg1: i32, %arg2: i32) -> (i32, i32) {
    %c0_i32 = arith.constant 0 : i32
    return %arg2, %arg1 : i32, i32
  }
  func.func @transform_2(%arg0: i32, %arg1: i32, %arg2: i32) -> (i32, i32) {
    %c0_i32 = arith.constant 0 : i32
    %c0_i32_0 = arith.constant 0 : i32
    return %c0_i32, %arg1 : i32, i32
  }
  func.func @transform_3(%arg0: i32, %arg1: i32, %arg2: i32) -> (i32, i32) {
    %c0_i32 = arith.constant 0 : i32
    return %arg0, %arg1 : i32, i32
  }
}

</mosaic_0001>

<llo_original>
// kernel: tpu_custom_call.1
$region0: #{tpu_custom_call.1}
  #allocation0 [shape = 'u32[]', space=smem, size = 0x4, offset = 0x4, fixed_abs, tag = 'smem constant byte address 0x4 - core index']
  #allocation1 [shape = 'u32[144,128]{1,0:T(1,128)}', space=vmem, size = 0x12000, scoped, tag = 'internal scratch']
  #allocation2 [shape = 'f32[32,128]{1,0:T(8,128)}', space=vmem, size = 0x4000, scoped, tag = 'scratch operand']
  %s0 = inlined_call_operand.hbm [shape: f32[32,128], index: 0, kind: input, shape index: {}]
  %s1 = inlined_call_operand.hbm [shape: f32[128,128], index: 1, kind: input, shape index: {}]
  %s2 = inlined_call_operand.vmem [shape: f32[1,128], index: 2, kind: input, shape index: {}]
  %s3 = inlined_call_operand.hbm [shape: f32[32,128], index: 3, kind: output, shape index: {}]
  %s4 = sld [smem:[#allocation0]]
  $region38: #{tpu_custom_call.1} parent=0
    _
  %s6 = ssub.s32 1, %s4
  %s7 = scalar_select 0, %s6, %s4
  $region1: #{tpu_custom_call.1} parent=0
    #allocation3 [shape = 'u8[16384]{0}', space=vmem, size = 0x4000, scoped, tag = 'input window, operand 0, single buffered']
    #allocation4 [shape = 's32[1]{0}', space=sflag, size = 0x4, scoped, tag = 'scoped memory for tpu_custom_call.1']
    #allocation5 [shape = 's32[1]{0}', space=sflag, size = 0x4, scoped, tag = 'scoped memory for tpu_custom_call.1']
    #allocation6 [shape = 'u8[65536]{0}', space=vmem, size = 0x10000, scoped, tag = 'input window, operand 1, single buffered']
    #allocation7 [shape = 's32[1]{0}', space=sflag, size = 0x4, scoped, tag = 'scoped memory for tpu_custom_call.1']
    #allocation8 [shape = 'u8[16384]{0}', space=vmem, size = 0x4000, scoped, tag = 'output window, operand 0, single buffered']
    %8 = vsyncpa [#allocation4], 0
    %9 = vsyncpa [#allocation7], 0
    %10 = vsyncpa [#allocation5], 0
    // Predicated region
    $region2: #{tpu_custom_call.1} parent=1 // pred_check
      _
    $region3: #{tpu_custom_call.1} parent=1 // pred_check_branch
      %12 = sbr.rel (0) target = $region5
    $region4: #{tpu_custom_call.1} parent=1 // pred_region
      %s14 = ssub.s32 512, 512
      %15 = vsyncadd [#allocation4], %s14
      %s16 = sshll.u32 [#allocation3], 4
      %s17 = int_to_ptr.vmem [resolvable:$true] %s16
      %22 = dma.hbm_to_vmem [thread:$0]  %s0, 512, %s17, [#allocation4], 128, 128, 8
    $region5: #{tpu_custom_call.1} parent=1 // pred_fallthru
      _
    // Predicated region
    $region6: #{tpu_custom_call.1} parent=1 // pred_check
      _
    $region7: #{tpu_custom_call.1} parent=1 // pred_check_branch
      %24 = sbr.rel (0) target = $region9
    $region8: #{tpu_custom_call.1} parent=1 // pred_region
      %s26 = ssub.s32 2048, 2048
      %27 = vsyncadd [#allocation7], %s26
      %s28 = sshll.u32 [#allocation6], 4
      %s29 = int_to_ptr.vmem [resolvable:$true] %s28
      %34 = dma.hbm_to_vmem [thread:$0]  %s1, 2048, %s29, [#allocation7], 128, 128, 8
    $region9: #{tpu_custom_call.1} parent=1 // pred_fallthru
      _
    // Predicated region
    $region10: #{tpu_custom_call.1} parent=1 // pred_check
      _
    $region11: #{tpu_custom_call.1} parent=1 // pred_check_branch
      %36 = sbr.rel (0) target = $region13
    $region12: #{tpu_custom_call.1} parent=1 // pred_region
      _
    $region13: #{tpu_custom_call.1} parent=1 // pred_fallthru
      _
    // Predicated region
    $region14: #{tpu_custom_call.1} parent=1 // pred_check
      _
    $region15: #{tpu_custom_call.1} parent=1 // pred_check_branch
      %38 = sbr.rel (0) target = $region17
    $region16: #{tpu_custom_call.1} parent=1 // pred_region
      %39 = dma.done [#allocation4], 512
    $region17: #{tpu_custom_call.1} parent=1 // pred_fallthru
      _
    // Predicated region
    $region18: #{tpu_custom_call.1} parent=1 // pred_check
      _
    $region19: #{tpu_custom_call.1} parent=1 // pred_check_branch
      %41 = sbr.rel (0) target = $region21
    $region20: #{tpu_custom_call.1} parent=1 // pred_region
      %42 = dma.done [#allocation7], 2048
    $region21: #{tpu_custom_call.1} parent=1 // pred_fallthru
      _
    %p44 = scmp.eq.s32.totalorder 0, 0
    // Predicated region
    $region22: #{tpu_custom_call.1} parent=1 // pred_check
      %p45 = pneg %p44
    $region23: #{tpu_custom_call.1} parent=1 // pred_check_branch
      %47 = sbr.rel (%p45) target = $region25
    $region24: #{tpu_custom_call.1} parent=1 // pred_region
      %48 = vst [vmem:[#allocation2] sm:$0xff] 0.0
      %49 = vst [vmem:[#allocation2 + $0x8] sm:$0xff] 0.0
      %50 = vst [vmem:[#allocation2 + $0x10] sm:$0xff] 0.0
      %51 = vst [vmem:[#allocation2 + $0x18] sm:$0xff] 0.0
    $region25: #{tpu_custom_call.1} parent=1 // pred_fallthru
      _
    %v52 = vld [vmem:[#allocation2] sm:$0xff]
    %v53 = vld [vmem:[#allocation2 + $0x8] sm:$0xff]
    %v54 = vld [vmem:[#allocation2 + $0x10] sm:$0xff]
    %v55 = vld [vmem:[#allocation2 + $0x18] sm:$0xff]
    %v56 = vld [vmem:[#allocation3] sm:$0xff]
    %v57 = vld [vmem:[#allocation3 + $0x8] sm:$0xff]
    %v58 = vld [vmem:[#allocation3 + $0x10] sm:$0xff]
    %v59 = vld [vmem:[#allocation3 + $0x18] sm:$0xff]
    %v60 = vpack.c.bf16 %v57, %v56
    %v61 = vpack.c.bf16 %v59, %v58
    %v62 = vld [vmem:[#allocation6] sm:$0xff]
    %v63 = vld [vmem:[#allocation6 + $0x8] sm:$0xff]
    %v64 = vld [vmem:[#allocation6 + $0x10] sm:$0xff]
    %v65 = vld [vmem:[#allocation6 + $0x18] sm:$0xff]
    %v66 = vld [vmem:[#allocation6 + $0x20] sm:$0xff]
    %v67 = vld [vmem:[#allocation6 + $0x28] sm:$0xff]
    %v68 = vld [vmem:[#allocation6 + $0x30] sm:$0xff]
    %v69 = vld [vmem:[#allocation6 + $0x38] sm:$0xff]
    %v70 = vld [vmem:[#allocation6 + $0x40] sm:$0xff]
    %v71 = vld [vmem:[#allocation6 + $0x48] sm:$0xff]
    %v72 = vld [vmem:[#allocation6 + $0x50] sm:$0xff]
    %v73 = vld [vmem:[#allocation6 + $0x58] sm:$0xff]
    %v74 = vld [vmem:[#allocation6 + $0x60] sm:$0xff]
    %v75 = vld [vmem:[#allocation6 + $0x68] sm:$0xff]
    %v76 = vld [vmem:[#allocation6 + $0x70] sm:$0xff]
    %v77 = vld [vmem:[#allocation6 + $0x78] sm:$0xff]
    %v78 = vpack.c.bf16 %v63, %v62
    %v79 = vpack.c.bf16 %v65, %v64
    %v80 = vpack.c.bf16 %v67, %v66
    %v81 = vpack.c.bf16 %v69, %v68
    %v82 = vpack.c.bf16 %v71, %v70
    %v83 = vpack.c.bf16 %v73, %v72
    %v84 = vpack.c.bf16 %v75, %v74
    %v85 = vpack.c.bf16 %v77, %v76
    %86 = vmatprep.subr.bf16.mxu0 0
    %87 = vmatpush1.bf16.msra.mxu0 %v85
    %88 = vmatprep.subr.bf16.mxu0 0
    %89 = vmatpush1.bf16.msra.mxu0 %v84
    %90 = vmatprep.subr.bf16.mxu0 0
    %91 = vmatpush1.bf16.msra.mxu0 %v83
    %92 = vmatprep.subr.bf16.mxu0 0
    %93 = vmatpush1.bf16.msra.mxu0 %v82
    %94 = vmatprep.subr.bf16.mxu0 0
    %95 = vmatpush1.bf16.msra.mxu0 %v81
    %96 = vmatprep.subr.bf16.mxu0 0
    %97 = vmatpush1.bf16.msra.mxu0 %v80
    %98 = vmatprep.subr.bf16.mxu0 0
    %99 = vmatpush1.bf16.msra.mxu0 %v79
    %100 = vmatprep.subr.bf16.mxu0 0
    %101 = vmatpush1.bf16.msra.mxu0 %v78
    %102 = vmatprep.subr.bf16.mxu0 0
    %103 = vmatpush2.bf16.msra.mxu0 0
    %104 = vmatprep.subr.bf16.mxu0 0
    %105 = vmatpush2.bf16.msra.mxu0 0
    %106 = vmatprep.subr.bf16.mxu0 0
    %107 = vmatpush2.bf16.msra.mxu0 0
    %108 = vmatprep.subr.bf16.mxu0 0
    %109 = vmatpush2.bf16.msra.mxu0 0
    %110 = vmatprep.subr.bf16.mxu0 0
    %111 = vmatpush2.bf16.msra.mxu0 0
    %112 = vmatprep.subr.bf16.mxu0 0
    %113 = vmatpush2.bf16.msra.mxu0 0
    %114 = vmatprep.subr.bf16.mxu0 0
    %115 = vmatpush2.bf16.msra.mxu0 0
    %116 = vmatprep.subr.bf16.mxu0 0
    %117 = vmatpush2.bf16.msra.mxu0 0
    %118 = vmatprep.mubr.bf16.mxu0 0
    %119 = vmatmul.mubr.bf16.gmra.mxu0 %v60
    %v120 = vpop.f32.mrf.mxu0
    %v121 = vadd.f32 0.0, %v120
    %v122 = vpop.f32.mrf.mxu0
    %v123 = vpop.f32.mrf.mxu0
    %v124 = vadd.f32 0.0, %v123
    %v125 = vpop.f32.mrf.mxu0
    %126 = vmatprep.mubr.bf16.mxu0 0
    %127 = vmatmul.mubr.bf16.gmra.mxu0 %v61
    %v128 = vpop.f32.mrf.mxu0
    %v129 = vadd.f32 0.0, %v128
    %v130 = vpop.f32.mrf.mxu0
    %v131 = vpop.f32.mrf.mxu0
    %v132 = vadd.f32 0.0, %v131
    %v133 = vpop.f32.mrf.mxu0
    %134 = vdwg.mxu0
    %v135 = vadd.f32 %v52, %v121
    %v136 = vadd.f32 %v53, %v124
    %v137 = vadd.f32 %v54, %v129
    %v138 = vadd.f32 %v55, %v132
    %139 = vst [vmem:[#allocation2] sm:$0xff] %v135
    %140 = vst [vmem:[#allocation2 + $0x8] sm:$0xff] %v136
    %141 = vst [vmem:[#allocation2 + $0x10] sm:$0xff] %v137
    %142 = vst [vmem:[#allocation2 + $0x18] sm:$0xff] %v138
    // Predicated region
    $region26: #{tpu_custom_call.1} parent=1 // pred_check
      %p143 = pneg %p44
    $region27: #{tpu_custom_call.1} parent=1 // pred_check_branch
      %145 = sbr.rel (%p143) target = $region29
    $region28: #{tpu_custom_call.1} parent=1 // pred_region
      %v146 = vld [vmem:[#allocation2] sm:$0xff]
      %v147 = vld [vmem:[#allocation2 + $0x8] sm:$0xff]
      %v148 = vld [vmem:[#allocation2 + $0x10] sm:$0xff]
      %v149 = vld [vmem:[#allocation2 + $0x18] sm:$0xff]
      %v150 = vld [vmem:[%s2] sm:$0x1]
      %v152 = vlaneseq
      %v153 = vshrl.u32 %v152, 7
      %v154 = vsub.s32 0, %v153
      %v155 = vrot.slane %v150, %v154
      %v157 = vadd.f32 %v146, %v155
      %v158 = vadd.f32 %v147, %v155
      %v159 = vadd.f32 %v148, %v155
      %v160 = vadd.f32 %v149, %v155
      %161 = vst [vmem:[#allocation8] sm:$0xff] %v157
      %162 = vst [vmem:[#allocation8 + $0x8] sm:$0xff] %v158
      %163 = vst [vmem:[#allocation8 + $0x10] sm:$0xff] %v159
      %164 = vst [vmem:[#allocation8 + $0x18] sm:$0xff] %v160
    $region29: #{tpu_custom_call.1} parent=1 // pred_fallthru
      _
    // Predicated region
    $region30: #{tpu_custom_call.1} parent=1 // pred_check
      _
    $region31: #{tpu_custom_call.1} parent=1 // pred_check_branch
      %166 = sbr.rel (0) target = $region33
    $region32: #{tpu_custom_call.1} parent=1 // pred_region
      %s168 = ssub.s32 512, 512
      %169 = vsyncadd [#allocation5], %s168
      %s170 = sshll.u32 [#allocation8], 4
      %s171 = int_to_ptr.vmem [resolvable:$true] %s170
      %176 = dma.vmem_to_hbm [thread:$0]  %s171, 512, %s3, [#allocation5], 128, 128, 8
    $region33: #{tpu_custom_call.1} parent=1 // pred_fallthru
      _
    // Predicated region
    $region34: #{tpu_custom_call.1} parent=1 // pred_check
      _
    $region35: #{tpu_custom_call.1} parent=1 // pred_check_branch
      %178 = sbr.rel (0) target = $region37
    $region36: #{tpu_custom_call.1} parent=1 // pred_region
      %179 = dma.done [#allocation5], 512
    $region37: #{tpu_custom_call.1} parent=1 // pred_fallthru
      _
    %180 = vsyncpa [#allocation4], 1
    %181 = vsyncpa [#allocation7], 1
    %182 = vsyncpa [#allocation5], 1

</llo_original>
